<compile_context>
chip_gen: v6e
topology: v6e:2x2x1
jax: 0.10.0
libtpu: 0.0.40
codegen_flags: <defaults>
</compile_context>

<pallas_src>
import math

import jax
import jax.numpy as jnp
from jax.experimental import pallas as pl
from jax.experimental.pallas import tpu as pltpu


def _out_size(n, k, padding, stride, dilation):
    return int(math.floor((n + 2 * padding - dilation * (k - 1) - 1) / stride + 1))


def _round_up(v, m):
    return ((v + m - 1) // m) * m


def unfold_nchw(x, kH, kW, padding, stride, dilation):
    """F.unfold equivalent: (B, C, H, W) -> (B, C*kH*kW, outH*outW).

    K ordering is channel-major / kH / kW (matches torch F.unfold and
    weight.reshape(L, O, K)); L is row-major over (outH, outW). Already the
    (B, K, L) layout the kernel consumes, so no transpose of the activations.
    """
    B, C, H, W = x.shape
    outH = _out_size(H, kH, padding, stride, dilation)
    outW = _out_size(W, kW, padding, stride, dilation)
    xp = jnp.pad(x, ((0, 0), (0, 0), (padding, padding), (padding, padding)))
    patches = []
    for i in range(kH):
        for j in range(kW):
            hi = i * dilation
            wj = j * dilation
            patches.append(
                xp[:, :, hi:hi + stride * outH:stride, wj:wj + stride * outW:stride])
    cols = jnp.stack(patches, axis=2)                  # (B, C, kH*kW, outH, outW)
    return cols.reshape(B, C * kH * kW, outH * outW), outH, outW


def plan_conv2d_local(batch, weight_shape, *, itemsize=4, tile_budget_bytes=16 << 20):
    """Static planning: tile sizes / padded dims / VMEM limit (per-generation safe)."""
    outH, outW, outC, inC, kH, kW = weight_shape
    K = inC * kH * kW
    L = outH * outW
    Kp = _round_up(K, 8)                      # whole 8-sublane chunks for the K reduction
    # Bytes of one lane-column of all double-buffered tiles (cols + weight + bias + out).
    per_lane = (batch * Kp + outC * Kp + outC + batch * outC) * itemsize
    max_tl = max(128, (tile_budget_bytes // (2 * per_lane)) // 128 * 128)
    tl = max(128, min(max_tl, _round_up(L, 128)))
    Lp = _round_up(L, tl)
    # Scoped VMEM: enough for the double-buffered tiles + headroom, capped below v7x's
    # 64 MiB physical VMEM (and well below v5e/v6e's 128 MiB).
    vmem_limit = int(min(max(32 << 20, 6 * tl * per_lane), 48 << 20))
    return dict(outH=outH, outW=outW, outC=outC, inC=inC, kH=kH, kW=kW,
                K=K, Kp=Kp, L=L, Lp=Lp, tl=tl, batch=batch,
                vmem_limit_bytes=vmem_limit)


def prepare_conv2d_local_params(weight, bias, plan):
    """ONE-TIME parameter re-layout (hoisted out of the hot path).

    weight: (outH, outW, outC, inC, kH, kW) -> (outC, Kp, Lp), lane-dense in L.
    bias:   (outC, outH, outW)              -> (outC, Lp).
    """
    O, K, Kp, L, Lp = plan["outC"], plan["K"], plan["Kp"], plan["L"], plan["Lp"]
    w_okl = jnp.transpose(weight.reshape(L, O, K), (1, 2, 0))          # (O, K, L)
    w_okl = jnp.pad(w_okl, ((0, 0), (0, Kp - K), (0, Lp - L)))
    b_ol = jnp.pad(bias.reshape(O, L), ((0, 0), (0, Lp - L)))
    return w_okl, b_ol


def _local_conv_kernel(cols_ref, w_ref, b_ref, o_ref):
    # cols_ref: (B, Kp, TL)  w_ref: (O, Kp, TL)  b_ref: (O, TL)  o_ref: (B, O, TL)
    B, Kp, _ = cols_ref.shape
    O = w_ref.shape[0]
    nchunks = Kp // 8

    # Each cols slab is read from VMEM exactly once and kept live across the o-loop.
    cs = [cols_ref[b].astype(jnp.float32) for b in range(B)]
    bias = b_ref[...].astype(jnp.float32)                               # (O, TL)

    rows = [[None] * O for _ in range(B)]
    for o in range(O):                                                  # static, unrolled
        w = w_ref[o].astype(jnp.float32)                                # one VMEM load per o
        for b in range(B):
            # f32 multiply-accumulate over K in 8-sublane chunks (VPU only),
            # then a single cross-sublane reduce (XLU) per output row.
            acc8 = cs[b][0:8] * w[0:8]
            for kc in range(1, nchunks):
                lo = kc * 8
                acc8 = acc8 + cs[b][lo:lo + 8] * w[lo:lo + 8]
            rows[b][o] = jnp.sum(acc8, axis=0, keepdims=True) + bias[o:o + 1, :]

    out = jnp.stack([jnp.concatenate(rows[b], axis=0) for b in range(B)], axis=0)
    o_ref[...] = out.astype(o_ref.dtype)                                # one dense block store


def conv2d_local_pallas(x, w_okl, b_ol, plan, *, stride=1, padding=0, dilation=1):
    """x: (B, inC, H, W); w_okl/b_ol from prepare_conv2d_local_params.

    Returns (B, outC, outH, outW), matching PyTorch Conv2dLocal.forward.
    """
    B, inC, H, W = x.shape
    assert B == plan["batch"] and inC == plan["inC"]
    K, Kp, L, Lp, tl = plan["K"], plan["Kp"], plan["L"], plan["Lp"], plan["tl"]
    O, outH, outW = plan["outC"], plan["outH"], plan["outW"]

    # im2col glue in the kernel's (B, K, L) layout, padded to (B, Kp, Lp).
    # TODO(synk): stream the unfold from x inside the kernel (row-windowed DMA or
    # allow_input_fusion) so the kH*kW-expanded cols tensor is never round-tripped
    # through HBM; kept host-side here for compile robustness.
    cols, oH, oW = unfold_nchw(x, plan["kH"], plan["kW"], padding, stride, dilation)
    assert (oH, oW) == (outH, outW)
    cols = jnp.pad(cols, ((0, 0), (0, Kp - K), (0, Lp - L)))

    grid = (Lp // tl,)
    out_bol = pl.pallas_call(
        _local_conv_kernel,
        out_shape=jax.ShapeDtypeStruct((B, O, Lp), x.dtype),
        grid_spec=pltpu.PrefetchScalarGridSpec(
            num_scalar_prefetch=0,
            grid=grid,
            in_specs=[
                pl.BlockSpec((B, Kp, tl), lambda i: (0, 0, i)),
                pl.BlockSpec((O, Kp, tl), lambda i: (0, 0, i)),
                pl.BlockSpec((O, tl), lambda i: (0, i)),
            ],
            out_specs=pl.BlockSpec((B, O, tl), lambda i: (0, 0, i)),
        ),
        compiler_params=pltpu.CompilerParams(
            dimension_semantics=("parallel",),     # independent L-tiles
            vmem_limit_bytes=plan["vmem_limit_bytes"],
        ),
    )(cols, w_okl, b_ol)

    # (B, O, L) -> NCHW is a free reshape (no HBM transpose round-trip).
    return out_bol[:, :, :L].reshape(B, O, outH, outW)


if __name__ == "__main__":
    # Small config consistent with Conv2dLocal(__init__)
    batch, in_channels, in_height, in_width = 2, 4, 16, 16
    out_channels, kernel_size, stride, padding, dilation = 4, 3, 1, 1, 1

    out_height = _out_size(in_height, kernel_size, padding, stride, dilation)
    out_width = _out_size(in_width, kernel_size, padding, stride, dilation)

    key = jax.random.PRNGKey(0)
    kx, kw, kb = jax.random.split(key, 3)

    # Deterministic param init mirroring reset_parameters(): U(-stdv, stdv)
    n = in_channels * kernel_size * kernel_size
    stdv = 1.0 / math.sqrt(n)
    weight = jax.random.uniform(
        kw,
        (out_height, out_width, out_channels, in_channels, kernel_size, kernel_size),
        minval=-stdv, maxval=stdv, dtype=jnp.float32,
    )
    bias = jax.random.uniform(
        kb, (out_channels, out_height, out_width),
        minval=-stdv, maxval=stdv, dtype=jnp.float32,
    )
    x = jax.random.normal(kx, (batch, in_channels, in_height, in_width), dtype=jnp.float32)

    # One-time planning + parameter re-layout (hoisted out of the forward).
    plan = plan_conv2d_local(batch, weight.shape, itemsize=x.dtype.itemsize)
    w_okl, b_ol = prepare_conv2d_local_params(weight, bias, plan)
    w_okl, b_ol = jax.block_until_ready((w_okl, b_ol))

    fwd = jax.jit(lambda xx: conv2d_local_pallas(
        xx, w_okl, b_ol, plan, stride=stride, padding=padding, dilation=dilation))
    out = jax.block_until_ready(fwd(x))

    # Pure-JAX reference (same math as torch conv2d_local).
    L = out_height * out_width
    Kdim = in_channels * kernel_size * kernel_size
    cols_ref, _, _ = unfold_nchw(x, kernel_size, kernel_size, padding, stride, dilation)
    w_ref_okl = jnp.transpose(weight.reshape(L, out_channels, Kdim), (1, 2, 0))       # (O,K,L)
    ref_bol = jnp.einsum("bkl,okl->bol", cols_ref, w_ref_okl) \
        + bias.reshape(out_channels, L)[None]
    ref = ref_bol.reshape(batch, out_channels, out_height, out_width)

    assert out.shape == (batch, out_channels, out_height, out_width)
    assert jnp.allclose(out, ref, atol=1e-5, rtol=1e-5)

    print("KERNEL_OK")
</pallas_src>

<mosaic_0001>
module attributes {stable_mosaic.version = 11 : i64} {
  func.func @_local_conv_kernel(%arg0: i32, %arg1: memref<2x40x256xf32, #tpu.memory_space<vmem>>, %arg2: memref<4x40x256xf32, #tpu.memory_space<vmem>>, %arg3: memref<4x256xf32, #tpu.memory_space<vmem>>, %arg4: memref<2x4x256xf32, #tpu.memory_space<vmem>>) attributes {dimension_semantics = [#tpu.dimension_semantics<parallel>], iteration_bounds = array<i64: 1>, scalar_prefetch = 0 : i64, scratch_operands = 0 : i64, tpu.core_type = #tpu.core_type<tc>, window_params = [{transform_indices = @transform_0, window_bounds = array<i64: 2, 40, 256>}, {transform_indices = @transform_1, window_bounds = array<i64: 4, 40, 256>}, {transform_indices = @transform_2, window_bounds = array<i64: 4, 256>}, {transform_indices = @transform_3, window_bounds = array<i64: 2, 4, 256>}]} {
    %c0 = arith.constant 0 : index
    %c0_0 = arith.constant 0 : index
    %c0_1 = arith.constant 0 : index
    %0 = vector.load %arg1[%c0, %c0_0, %c0_1] : memref<2x40x256xf32, #tpu.memory_space<vmem>>, vector<1x40x256xf32>
    %1 = vector.shape_cast %0 : vector<1x40x256xf32> to vector<40x256xf32>
    %c1 = arith.constant 1 : index
    %c0_2 = arith.constant 0 : index
    %c0_3 = arith.constant 0 : index
    %2 = vector.load %arg1[%c1, %c0_2, %c0_3] : memref<2x40x256xf32, #tpu.memory_space<vmem>>, vector<1x40x256xf32>
    %3 = vector.shape_cast %2 : vector<1x40x256xf32> to vector<40x256xf32>
    %c0_4 = arith.constant 0 : index
    %c0_5 = arith.constant 0 : index
    %4 = vector.load %arg3[%c0_4, %c0_5] : memref<4x256xf32, #tpu.memory_space<vmem>>, vector<4x256xf32>
    %c0_6 = arith.constant 0 : index
    %c0_7 = arith.constant 0 : index
    %c0_8 = arith.constant 0 : index
    %5 = vector.load %arg2[%c0_6, %c0_7, %c0_8] : memref<4x40x256xf32, #tpu.memory_space<vmem>>, vector<1x40x256xf32>
    %6 = vector.shape_cast %5 : vector<1x40x256xf32> to vector<40x256xf32>
    %7 = vector.extract_strided_slice %1 {offsets = [0, 0], sizes = [8, 256], strides = [1, 1]} : vector<40x256xf32> to vector<8x256xf32>
    %8 = vector.extract_strided_slice %6 {offsets = [0, 0], sizes = [8, 256], strides = [1, 1]} : vector<40x256xf32> to vector<8x256xf32>
    %9 = arith.mulf %7, %8 : vector<8x256xf32>
    %10 = vector.extract_strided_slice %1 {offsets = [8, 0], sizes = [8, 256], strides = [1, 1]} : vector<40x256xf32> to vector<8x256xf32>
    %11 = vector.extract_strided_slice %6 {offsets = [8, 0], sizes = [8, 256], strides = [1, 1]} : vector<40x256xf32> to vector<8x256xf32>
    %12 = arith.mulf %10, %11 : vector<8x256xf32>
    %13 = arith.addf %9, %12 : vector<8x256xf32>
    %14 = vector.extract_strided_slice %1 {offsets = [16, 0], sizes = [8, 256], strides = [1, 1]} : vector<40x256xf32> to vector<8x256xf32>
    %15 = vector.extract_strided_slice %6 {offsets = [16, 0], sizes = [8, 256], strides = [1, 1]} : vector<40x256xf32> to vector<8x256xf32>
    %16 = arith.mulf %14, %15 : vector<8x256xf32>
    %17 = arith.addf %13, %16 : vector<8x256xf32>
    %18 = vector.extract_strided_slice %1 {offsets = [24, 0], sizes = [8, 256], strides = [1, 1]} : vector<40x256xf32> to vector<8x256xf32>
    %19 = vector.extract_strided_slice %6 {offsets = [24, 0], sizes = [8, 256], strides = [1, 1]} : vector<40x256xf32> to vector<8x256xf32>
    %20 = arith.mulf %18, %19 : vector<8x256xf32>
    %21 = arith.addf %17, %20 : vector<8x256xf32>
    %22 = vector.extract_strided_slice %1 {offsets = [32, 0], sizes = [8, 256], strides = [1, 1]} : vector<40x256xf32> to vector<8x256xf32>
    %23 = vector.extract_strided_slice %6 {offsets = [32, 0], sizes = [8, 256], strides = [1, 1]} : vector<40x256xf32> to vector<8x256xf32>
    %24 = arith.mulf %22, %23 : vector<8x256xf32>
    %25 = arith.addf %21, %24 : vector<8x256xf32>
    %cst = arith.constant dense<0.000000e+00> : vector<256xf32>
    %26 = vector.multi_reduction <add>, %25, %cst [0] : vector<8x256xf32> to vector<256xf32>
    %27 = vector.shape_cast %26 : vector<256xf32> to vector<1x256xf32>
    %28 = vector.extract_strided_slice %4 {offsets = [0, 0], sizes = [1, 256], strides = [1, 1]} : vector<4x256xf32> to vector<1x256xf32>
    %29 = arith.addf %27, %28 : vector<1x256xf32>
    %30 = vector.extract_strided_slice %3 {offsets = [0, 0], sizes = [8, 256], strides = [1, 1]} : vector<40x256xf32> to vector<8x256xf32>
    %31 = vector.extract_strided_slice %6 {offsets = [0, 0], sizes = [8, 256], strides = [1, 1]} : vector<40x256xf32> to vector<8x256xf32>
    %32 = arith.mulf %30, %31 : vector<8x256xf32>
    %33 = vector.extract_strided_slice %3 {offsets = [8, 0], sizes = [8, 256], strides = [1, 1]} : vector<40x256xf32> to vector<8x256xf32>
    %34 = vector.extract_strided_slice %6 {offsets = [8, 0], sizes = [8, 256], strides = [1, 1]} : vector<40x256xf32> to vector<8x256xf32>
    %35 = arith.mulf %33, %34 : vector<8x256xf32>
    %36 = arith.addf %32, %35 : vector<8x256xf32>
    %37 = vector.extract_strided_slice %3 {offsets = [16, 0], sizes = [8, 256], strides = [1, 1]} : vector<40x256xf32> to vector<8x256xf32>
    %38 = vector.extract_strided_slice %6 {offsets = [16, 0], sizes = [8, 256], strides = [1, 1]} : vector<40x256xf32> to vector<8x256xf32>
    %39 = arith.mulf %37, %38 : vector<8x256xf32>
    %40 = arith.addf %36, %39 : vector<8x256xf32>
    %41 = vector.extract_strided_slice %3 {offsets = [24, 0], sizes = [8, 256], strides = [1, 1]} : vector<40x256xf32> to vector<8x256xf32>
    %42 = vector.extract_strided_slice %6 {offsets = [24, 0], sizes = [8, 256], strides = [1, 1]} : vector<40x256xf32> to vector<8x256xf32>
    %43 = arith.mulf %41, %42 : vector<8x256xf32>
    %44 = arith.addf %40, %43 : vector<8x256xf32>
    %45 = vector.extract_strided_slice %3 {offsets = [32, 0], sizes = [8, 256], strides = [1, 1]} : vector<40x256xf32> to vector<8x256xf32>
    %46 = vector.extract_strided_slice %6 {offsets = [32, 0], sizes = [8, 256], strides = [1, 1]} : vector<40x256xf32> to vector<8x256xf32>
    %47 = arith.mulf %45, %46 : vector<8x256xf32>
    %48 = arith.addf %44, %47 : vector<8x256xf32>
    %cst_9 = arith.constant dense<0.000000e+00> : vector<256xf32>
    %49 = vector.multi_reduction <add>, %48, %cst_9 [0] : vector<8x256xf32> to vector<256xf32>
    %50 = vector.shape_cast %49 : vector<256xf32> to vector<1x256xf32>
    %51 = vector.extract_strided_slice %4 {offsets = [0, 0], sizes = [1, 256], strides = [1, 1]} : vector<4x256xf32> to vector<1x256xf32>
    %52 = arith.addf %50, %51 : vector<1x256xf32>
    %c1_10 = arith.constant 1 : index
    %c0_11 = arith.constant 0 : index
    %c0_12 = arith.constant 0 : index
    %53 = vector.load %arg2[%c1_10, %c0_11, %c0_12] : memref<4x40x256xf32, #tpu.memory_space<vmem>>, vector<1x40x256xf32>
    %54 = vector.shape_cast %53 : vector<1x40x256xf32> to vector<40x256xf32>
    %55 = vector.extract_strided_slice %1 {offsets = [0, 0], sizes = [8, 256], strides = [1, 1]} : vector<40x256xf32> to vector<8x256xf32>
    %56 = vector.extract_strided_slice %54 {offsets = [0, 0], sizes = [8, 256], strides = [1, 1]} : vector<40x256xf32> to vector<8x256xf32>
    %57 = arith.mulf %55, %56 : vector<8x256xf32>
    %58 = vector.extract_strided_slice %1 {offsets = [8, 0], sizes = [8, 256], strides = [1, 1]} : vector<40x256xf32> to vector<8x256xf32>
    %59 = vector.extract_strided_slice %54 {offsets = [8, 0], sizes = [8, 256], strides = [1, 1]} : vector<40x256xf32> to vector<8x256xf32>
    %60 = arith.mulf %58, %59 : vector<8x256xf32>
    %61 = arith.addf %57, %60 : vector<8x256xf32>
    %62 = vector.extract_strided_slice %1 {offsets = [16, 0], sizes = [8, 256], strides = [1, 1]} : vector<40x256xf32> to vector<8x256xf32>
    %63 = vector.extract_strided_slice %54 {offsets = [16, 0], sizes = [8, 256], strides = [1, 1]} : vector<40x256xf32> to vector<8x256xf32>
    %64 = arith.mulf %62, %63 : vector<8x256xf32>
    %65 = arith.addf %61, %64 : vector<8x256xf32>
    %66 = vector.extract_strided_slice %1 {offsets = [24, 0], sizes = [8, 256], strides = [1, 1]} : vector<40x256xf32> to vector<8x256xf32>
    %67 = vector.extract_strided_slice %54 {offsets = [24, 0], sizes = [8, 256], strides = [1, 1]} : vector<40x256xf32> to vector<8x256xf32>
    %68 = arith.mulf %66, %67 : vector<8x256xf32>
    %69 = arith.addf %65, %68 : vector<8x256xf32>
    %70 = vector.extract_strided_slice %1 {offsets = [32, 0], sizes = [8, 256], strides = [1, 1]} : vector<40x256xf32> to vector<8x256xf32>
    %71 = vector.extract_strided_slice %54 {offsets = [32, 0], sizes = [8, 256], strides = [1, 1]} : vector<40x256xf32> to vector<8x256xf32>
    %72 = arith.mulf %70, %71 : vector<8x256xf32>
    %73 = arith.addf %69, %72 : vector<8x256xf32>
    %cst_13 = arith.constant dense<0.000000e+00> : vector<256xf32>
    %74 = vector.multi_reduction <add>, %73, %cst_13 [0] : vector<8x256xf32> to vector<256xf32>
    %75 = vector.shape_cast %74 : vector<256xf32> to vector<1x256xf32>
    %76 = vector.extract_strided_slice %4 {offsets = [1, 0], sizes = [1, 256], strides = [1, 1]} : vector<4x256xf32> to vector<1x256xf32>
    %77 = arith.addf %75, %76 : vector<1x256xf32>
    %78 = vector.extract_strided_slice %3 {offsets = [0, 0], sizes = [8, 256], strides = [1, 1]} : vector<40x256xf32> to vector<8x256xf32>
    %79 = vector.extract_strided_slice %54 {offsets = [0, 0], sizes = [8, 256], strides = [1, 1]} : vector<40x256xf32> to vector<8x256xf32>
    %80 = arith.mulf %78, %79 : vector<8x256xf32>
    %81 = vector.extract_strided_slice %3 {offsets = [8, 0], sizes = [8, 256], strides = [1, 1]} : vector<40x256xf32> to vector<8x256xf32>
    %82 = vector.extract_strided_slice %54 {offsets = [8, 0], sizes = [8, 256], strides = [1, 1]} : vector<40x256xf32> to vector<8x256xf32>
    %83 = arith.mulf %81, %82 : vector<8x256xf32>
    %84 = arith.addf %80, %83 : vector<8x256xf32>
    %85 = vector.extract_strided_slice %3 {offsets = [16, 0], sizes = [8, 256], strides = [1, 1]} : vector<40x256xf32> to vector<8x256xf32>
    %86 = vector.extract_strided_slice %54 {offsets = [16, 0], sizes = [8, 256], strides = [1, 1]} : vector<40x256xf32> to vector<8x256xf32>
    %87 = arith.mulf %85, %86 : vector<8x256xf32>
    %88 = arith.addf %84, %87 : vector<8x256xf32>
    %89 = vector.extract_strided_slice %3 {offsets = [24, 0], sizes = [8, 256], strides = [1, 1]} : vector<40x256xf32> to vector<8x256xf32>
    %90 = vector.extract_strided_slice %54 {offsets = [24, 0], sizes = [8, 256], strides = [1, 1]} : vector<40x256xf32> to vector<8x256xf32>
    %91 = arith.mulf %89, %90 : vector<8x256xf32>
    %92 = arith.addf %88, %91 : vector<8x256xf32>
    %93 = vector.extract_strided_slice %3 {offsets = [32, 0], sizes = [8, 256], strides = [1, 1]} : vector<40x256xf32> to vector<8x256xf32>
    %94 = vector.extract_strided_slice %54 {offsets = [32, 0], sizes = [8, 256], strides = [1, 1]} : vector<40x256xf32> to vector<8x256xf32>
    %95 = arith.mulf %93, %94 : vector<8x256xf32>
    %96 = arith.addf %92, %95 : vector<8x256xf32>
    %cst_14 = arith.constant dense<0.000000e+00> : vector<256xf32>
    %97 = vector.multi_reduction <add>, %96, %cst_14 [0] : vector<8x256xf32> to vector<256xf32>
    %98 = vector.shape_cast %97 : vector<256xf32> to vector<1x256xf32>
    %99 = vector.extract_strided_slice %4 {offsets = [1, 0], sizes = [1, 256], strides = [1, 1]} : vector<4x256xf32> to vector<1x256xf32>
    %100 = arith.addf %98, %99 : vector<1x256xf32>
    %c2 = arith.constant 2 : index
    %c0_15 = arith.constant 0 : index
    %c0_16 = arith.constant 0 : index
    %101 = vector.load %arg2[%c2, %c0_15, %c0_16] : memref<4x40x256xf32, #tpu.memory_space<vmem>>, vector<1x40x256xf32>
    %102 = vector.shape_cast %101 : vector<1x40x256xf32> to vector<40x256xf32>
    %103 = vector.extract_strided_slice %1 {offsets = [0, 0], sizes = [8, 256], strides = [1, 1]} : vector<40x256xf32> to vector<8x256xf32>
    %104 = vector.extract_strided_slice %102 {offsets = [0, 0], sizes = [8, 256], strides = [1, 1]} : vector<40x256xf32> to vector<8x256xf32>
    %105 = arith.mulf %103, %104 : vector<8x256xf32>
    %106 = vector.extract_strided_slice %1 {offsets = [8, 0], sizes = [8, 256], strides = [1, 1]} : vector<40x256xf32> to vector<8x256xf32>
    %107 = vector.extract_strided_slice %102 {offsets = [8, 0], sizes = [8, 256], strides = [1, 1]} : vector<40x256xf32> to vector<8x256xf32>
    %108 = arith.mulf %106, %107 : vector<8x256xf32>
    %109 = arith.addf %105, %108 : vector<8x256xf32>
    %110 = vector.extract_strided_slice %1 {offsets = [16, 0], sizes = [8, 256], strides = [1, 1]} : vector<40x256xf32> to vector<8x256xf32>
    %111 = vector.extract_strided_slice %102 {offsets = [16, 0], sizes = [8, 256], strides = [1, 1]} : vector<40x256xf32> to vector<8x256xf32>
    %112 = arith.mulf %110, %111 : vector<8x256xf32>
    %113 = arith.addf %109, %112 : vector<8x256xf32>
    %114 = vector.extract_strided_slice %1 {offsets = [24, 0], sizes = [8, 256], strides = [1, 1]} : vector<40x256xf32> to vector<8x256xf32>
    %115 = vector.extract_strided_slice %102 {offsets = [24, 0], sizes = [8, 256], strides = [1, 1]} : vector<40x256xf32> to vector<8x256xf32>
    %116 = arith.mulf %114, %115 : vector<8x256xf32>
    %117 = arith.addf %113, %116 : vector<8x256xf32>
    %118 = vector.extract_strided_slice %1 {offsets = [32, 0], sizes = [8, 256], strides = [1, 1]} : vector<40x256xf32> to vector<8x256xf32>
    %119 = vector.extract_strided_slice %102 {offsets = [32, 0], sizes = [8, 256], strides = [1, 1]} : vector<40x256xf32> to vector<8x256xf32>
    %120 = arith.mulf %118, %119 : vector<8x256xf32>
    %121 = arith.addf %117, %120 : vector<8x256xf32>
    %cst_17 = arith.constant dense<0.000000e+00> : vector<256xf32>
    %122 = vector.multi_reduction <add>, %121, %cst_17 [0] : vector<8x256xf32> to vector<256xf32>
    %123 = vector.shape_cast %122 : vector<256xf32> to vector<1x256xf32>
    %124 = vector.extract_strided_slice %4 {offsets = [2, 0], sizes = [1, 256], strides = [1, 1]} : vector<4x256xf32> to vector<1x256xf32>
    %125 = arith.addf %123, %124 : vector<1x256xf32>
    %126 = vector.extract_strided_slice %3 {offsets = [0, 0], sizes = [8, 256], strides = [1, 1]} : vector<40x256xf32> to vector<8x256xf32>
    %127 = vector.extract_strided_slice %102 {offsets = [0, 0], sizes = [8, 256], strides = [1, 1]} : vector<40x256xf32> to vector<8x256xf32>
    %128 = arith.mulf %126, %127 : vector<8x256xf32>
    %129 = vector.extract_strided_slice %3 {offsets = [8, 0], sizes = [8, 256], strides = [1, 1]} : vector<40x256xf32> to vector<8x256xf32>
    %130 = vector.extract_strided_slice %102 {offsets = [8, 0], sizes = [8, 256], strides = [1, 1]} : vector<40x256xf32> to vector<8x256xf32>
    %131 = arith.mulf %129, %130 : vector<8x256xf32>
    %132 = arith.addf %128, %131 : vector<8x256xf32>
    %133 = vector.extract_strided_slice %3 {offsets = [16, 0], sizes = [8, 256], strides = [1, 1]} : vector<40x256xf32> to vector<8x256xf32>
    %134 = vector.extract_strided_slice %102 {offsets = [16, 0], sizes = [8, 256], strides = [1, 1]} : vector<40x256xf32> to vector<8x256xf32>
    %135 = arith.mulf %133, %134 : vector<8x256xf32>
    %136 = arith.addf %132, %135 : vector<8x256xf32>
    %137 = vector.extract_strided_slice %3 {offsets = [24, 0], sizes = [8, 256], strides = [1, 1]} : vector<40x256xf32> to vector<8x256xf32>
    %138 = vector.extract_strided_slice %102 {offsets = [24, 0], sizes = [8, 256], strides = [1, 1]} : vector<40x256xf32> to vector<8x256xf32>
    %139 = arith.mulf %137, %138 : vector<8x256xf32>
    %140 = arith.addf %136, %139 : vector<8x256xf32>
    %141 = vector.extract_strided_slice %3 {offsets = [32, 0], sizes = [8, 256], strides = [1, 1]} : vector<40x256xf32> to vector<8x256xf32>
    %142 = vector.extract_strided_slice %102 {offsets = [32, 0], sizes = [8, 256], strides = [1, 1]} : vector<40x256xf32> to vector<8x256xf32>
    %143 = arith.mulf %141, %142 : vector<8x256xf32>
    %144 = arith.addf %140, %143 : vector<8x256xf32>
    %cst_18 = arith.constant dense<0.000000e+00> : vector<256xf32>
    %145 = vector.multi_reduction <add>, %144, %cst_18 [0] : vector<8x256xf32> to vector<256xf32>
    %146 = vector.shape_cast %145 : vector<256xf32> to vector<1x256xf32>
    %147 = vector.extract_strided_slice %4 {offsets = [2, 0], sizes = [1, 256], strides = [1, 1]} : vector<4x256xf32> to vector<1x256xf32>
    %148 = arith.addf %146, %147 : vector<1x256xf32>
    %c3 = arith.constant 3 : index
    %c0_19 = arith.constant 0 : index
    %c0_20 = arith.constant 0 : index
    %149 = vector.load %arg2[%c3, %c0_19, %c0_20] : memref<4x40x256xf32, #tpu.memory_space<vmem>>, vector<1x40x256xf32>
    %150 = vector.shape_cast %149 : vector<1x40x256xf32> to vector<40x256xf32>
    %151 = vector.extract_strided_slice %1 {offsets = [0, 0], sizes = [8, 256], strides = [1, 1]} : vector<40x256xf32> to vector<8x256xf32>
    %152 = vector.extract_strided_slice %150 {offsets = [0, 0], sizes = [8, 256], strides = [1, 1]} : vector<40x256xf32> to vector<8x256xf32>
    %153 = arith.mulf %151, %152 : vector<8x256xf32>
    %154 = vector.extract_strided_slice %1 {offsets = [8, 0], sizes = [8, 256], strides = [1, 1]} : vector<40x256xf32> to vector<8x256xf32>
    %155 = vector.extract_strided_slice %150 {offsets = [8, 0], sizes = [8, 256], strides = [1, 1]} : vector<40x256xf32> to vector<8x256xf32>
    %156 = arith.mulf %154, %155 : vector<8x256xf32>
    %157 = arith.addf %153, %156 : vector<8x256xf32>
    %158 = vector.extract_strided_slice %1 {offsets = [16, 0], sizes = [8, 256], strides = [1, 1]} : vector<40x256xf32> to vector<8x256xf32>
    %159 = vector.extract_strided_slice %150 {offsets = [16, 0], sizes = [8, 256], strides = [1, 1]} : vector<40x256xf32> to vector<8x256xf32>
    %160 = arith.mulf %158, %159 : vector<8x256xf32>
    %161 = arith.addf %157, %160 : vector<8x256xf32>
    %162 = vector.extract_strided_slice %1 {offsets = [24, 0], sizes = [8, 256], strides = [1, 1]} : vector<40x256xf32> to vector<8x256xf32>
    %163 = vector.extract_strided_slice %150 {offsets = [24, 0], sizes = [8, 256], strides = [1, 1]} : vector<40x256xf32> to vector<8x256xf32>
    %164 = arith.mulf %162, %163 : vector<8x256xf32>
    %165 = arith.addf %161, %164 : vector<8x256xf32>
    %166 = vector.extract_strided_slice %1 {offsets = [32, 0], sizes = [8, 256], strides = [1, 1]} : vector<40x256xf32> to vector<8x256xf32>
    %167 = vector.extract_strided_slice %150 {offsets = [32, 0], sizes = [8, 256], strides = [1, 1]} : vector<40x256xf32> to vector<8x256xf32>
    %168 = arith.mulf %166, %167 : vector<8x256xf32>
    %169 = arith.addf %165, %168 : vector<8x256xf32>
    %cst_21 = arith.constant dense<0.000000e+00> : vector<256xf32>
    %170 = vector.multi_reduction <add>, %169, %cst_21 [0] : vector<8x256xf32> to vector<256xf32>
    %171 = vector.shape_cast %170 : vector<256xf32> to vector<1x256xf32>
    %172 = vector.extract_strided_slice %4 {offsets = [3, 0], sizes = [1, 256], strides = [1, 1]} : vector<4x256xf32> to vector<1x256xf32>
    %173 = arith.addf %171, %172 : vector<1x256xf32>
    %174 = vector.extract_strided_slice %3 {offsets = [0, 0], sizes = [8, 256], strides = [1, 1]} : vector<40x256xf32> to vector<8x256xf32>
    %175 = vector.extract_strided_slice %150 {offsets = [0, 0], sizes = [8, 256], strides = [1, 1]} : vector<40x256xf32> to vector<8x256xf32>
    %176 = arith.mulf %174, %175 : vector<8x256xf32>
    %177 = vector.extract_strided_slice %3 {offsets = [8, 0], sizes = [8, 256], strides = [1, 1]} : vector<40x256xf32> to vector<8x256xf32>
    %178 = vector.extract_strided_slice %150 {offsets = [8, 0], sizes = [8, 256], strides = [1, 1]} : vector<40x256xf32> to vector<8x256xf32>
    %179 = arith.mulf %177, %178 : vector<8x256xf32>
    %180 = arith.addf %176, %179 : vector<8x256xf32>
    %181 = vector.extract_strided_slice %3 {offsets = [16, 0], sizes = [8, 256], strides = [1, 1]} : vector<40x256xf32> to vector<8x256xf32>
    %182 = vector.extract_strided_slice %150 {offsets = [16, 0], sizes = [8, 256], strides = [1, 1]} : vector<40x256xf32> to vector<8x256xf32>
    %183 = arith.mulf %181, %182 : vector<8x256xf32>
    %184 = arith.addf %180, %183 : vector<8x256xf32>
    %185 = vector.extract_strided_slice %3 {offsets = [24, 0], sizes = [8, 256], strides = [1, 1]} : vector<40x256xf32> to vector<8x256xf32>
    %186 = vector.extract_strided_slice %150 {offsets = [24, 0], sizes = [8, 256], strides = [1, 1]} : vector<40x256xf32> to vector<8x256xf32>
    %187 = arith.mulf %185, %186 : vector<8x256xf32>
    %188 = arith.addf %184, %187 : vector<8x256xf32>
    %189 = vector.extract_strided_slice %3 {offsets = [32, 0], sizes = [8, 256], strides = [1, 1]} : vector<40x256xf32> to vector<8x256xf32>
    %190 = vector.extract_strided_slice %150 {offsets = [32, 0], sizes = [8, 256], strides = [1, 1]} : vector<40x256xf32> to vector<8x256xf32>
    %191 = arith.mulf %189, %190 : vector<8x256xf32>
    %192 = arith.addf %188, %191 : vector<8x256xf32>
    %cst_22 = arith.constant dense<0.000000e+00> : vector<256xf32>
    %193 = vector.multi_reduction <add>, %192, %cst_22 [0] : vector<8x256xf32> to vector<256xf32>
    %194 = vector.shape_cast %193 : vector<256xf32> to vector<1x256xf32>
    %195 = vector.extract_strided_slice %4 {offsets = [3, 0], sizes = [1, 256], strides = [1, 1]} : vector<4x256xf32> to vector<1x256xf32>
    %196 = arith.addf %194, %195 : vector<1x256xf32>
    %197 = tpu.concatenate %29, %77, %125, %173 in 0 : vector<1x256xf32>, vector<1x256xf32>, vector<1x256xf32>, vector<1x256xf32> -> vector<4x256xf32>
    %198 = tpu.concatenate %52, %100, %148, %196 in 0 : vector<1x256xf32>, vector<1x256xf32>, vector<1x256xf32>, vector<1x256xf32> -> vector<4x256xf32>
    %199 = vector.shape_cast %197 : vector<4x256xf32> to vector<1x4x256xf32>
    %200 = vector.shape_cast %198 : vector<4x256xf32> to vector<1x4x256xf32>
    %201 = tpu.concatenate %199, %200 in 0 : vector<1x4x256xf32>, vector<1x4x256xf32> -> vector<2x4x256xf32>
    %c0_23 = arith.constant 0 : index
    %c0_24 = arith.constant 0 : index
    %c0_25 = arith.constant 0 : index
    %202 = vector.load %arg4[%c0_23, %c0_24, %c0_25] : memref<2x4x256xf32, #tpu.memory_space<vmem>>, vector<2x4x256xf32>
    tpu.vector_store %arg4[%c0_23, %c0_24, %c0_25], %201 {strides = array<i32>} : memref<2x4x256xf32, #tpu.memory_space<vmem>>, vector<2x4x256xf32>,
    return
  }
  func.func @transform_0(%arg0: i32) -> (i32, i32, i32) {
    %c0_i32 = arith.constant 0 : i32
    %c0_i32_0 = arith.constant 0 : i32
    %c0_i32_1 = arith.constant 0 : i32
    return %c0_i32, %c0_i32_0, %arg0 : i32, i32, i32
  }
  func.func @transform_1(%arg0: i32) -> (i32, i32, i32) {
    %c0_i32 = arith.constant 0 : i32
    %c0_i32_0 = arith.constant 0 : i32
    %c0_i32_1 = arith.constant 0 : i32
    return %c0_i32, %c0_i32_0, %arg0 : i32, i32, i32
  }
  func.func @transform_2(%arg0: i32) -> (i32, i32) {
    %c0_i32 = arith.constant 0 : i32
    %c0_i32_0 = arith.constant 0 : i32
    return %c0_i32, %arg0 : i32, i32
  }
  func.func @transform_3(%arg0: i32) -> (i32, i32, i32) {
    %c0_i32 = arith.constant 0 : i32
    %c0_i32_0 = arith.constant 0 : i32
    %c0_i32_1 = arith.constant 0 : i32
    return %c0_i32, %c0_i32_0, %arg0 : i32, i32, i32
  }
}

</mosaic_0001>

<llo_original>
// kernel: _lambda_.1
$region0: #{_lambda_.1}
  #allocation0 [shape = 'u32[]', space=smem, size = 0x4, offset = 0x4, fixed_abs, tag = 'smem constant byte address 0x4 - core index']
  #allocation1 [shape = 'u32[144,128]{1,0:T(1,128)}', space=vmem, size = 0x12000, scoped, tag = 'internal scratch']
  %s0 = inlined_call_operand.vmem [shape: f32[2,40,256], index: 0, kind: input, shape index: {}]
  %s1 = inlined_call_operand.vmem [shape: f32[4,40,256], index: 1, kind: input, shape index: {}]
  %s2 = inlined_call_operand.vmem [shape: f32[4,256], index: 2, kind: input, shape index: {}]
  %s3 = inlined_call_operand.vmem [shape: f32[2,4,256], index: 3, kind: output, shape index: {}]
  %s4 = sld [smem:[#allocation0]]
  $region22: #{_lambda_.1} parent=0
    _
  %s6 = ssub.s32 1, %s4
  %s7 = scalar_select 0, %s6, %s4
  // Predicated region
  $region2: #{_lambda_.1} parent=0 // pred_check
    _
  $region3: #{_lambda_.1} parent=0 // pred_check_branch
    %9 = sbr.rel (0) target = $region5
  $region4: #{_lambda_.1} parent=0 // pred_region
    _
  $region5: #{_lambda_.1} parent=0 // pred_fallthru
    _
  // Predicated region
  $region6: #{_lambda_.1} parent=0 // pred_check
    _
  $region7: #{_lambda_.1} parent=0 // pred_check_branch
    %11 = sbr.rel (0) target = $region9
  $region8: #{_lambda_.1} parent=0 // pred_region
    _
  $region9: #{_lambda_.1} parent=0 // pred_fallthru
    _
  // Predicated region
  $region10: #{_lambda_.1} parent=0 // pred_check
    _
  $region11: #{_lambda_.1} parent=0 // pred_check_branch
    %13 = sbr.rel (0) target = $region13
  $region12: #{_lambda_.1} parent=0 // pred_region
    _
  $region13: #{_lambda_.1} parent=0 // pred_fallthru
    _
  %v14 = vld [vmem:[%s0] sm:$0xff]
  %v15 = vld [vmem:[%s0 + $0x8] sm:$0xff]
  %v16 = vld [vmem:[%s0 + $0x10] sm:$0xff]
  %v17 = vld [vmem:[%s0 + $0x18] sm:$0xff]
  %v18 = vld [vmem:[%s0 + $0x20] sm:$0xff]
  %v19 = vld [vmem:[%s0 + $0x28] sm:$0xff]
  %v20 = vld [vmem:[%s0 + $0x30] sm:$0xff]
  %v21 = vld [vmem:[%s0 + $0x38] sm:$0xff]
  %v22 = vld [vmem:[%s0 + $0x40] sm:$0xff]
  %v23 = vld [vmem:[%s0 + $0x48] sm:$0xff]
  %s24 = scalar_lea.vmem %s0, 80
  %v25 = vld [vmem:[%s24] sm:$0xff]
  %v26 = vld [vmem:[%s24 + $0x8] sm:$0xff]
  %v27 = vld [vmem:[%s24 + $0x10] sm:$0xff]
  %v28 = vld [vmem:[%s24 + $0x18] sm:$0xff]
  %v29 = vld [vmem:[%s24 + $0x20] sm:$0xff]
  %v30 = vld [vmem:[%s24 + $0x28] sm:$0xff]
  %v31 = vld [vmem:[%s24 + $0x30] sm:$0xff]
  %v32 = vld [vmem:[%s24 + $0x38] sm:$0xff]
  %v33 = vld [vmem:[%s24 + $0x40] sm:$0xff]
  %v34 = vld [vmem:[%s24 + $0x48] sm:$0xff]
  %v35 = vld [vmem:[%s2] sm:$0xff]
  %v36 = vld [vmem:[%s1] sm:$0xff]
  %v37 = vld [vmem:[%s1 + $0x8] sm:$0xff]
  %v38 = vld [vmem:[%s1 + $0x10] sm:$0xff]
  %v39 = vld [vmem:[%s1 + $0x18] sm:$0xff]
  %v40 = vld [vmem:[%s1 + $0x20] sm:$0xff]
  %v41 = vld [vmem:[%s1 + $0x28] sm:$0xff]
  %v42 = vld [vmem:[%s1 + $0x30] sm:$0xff]
  %v43 = vld [vmem:[%s1 + $0x38] sm:$0xff]
  %v44 = vld [vmem:[%s1 + $0x40] sm:$0xff]
  %v45 = vld [vmem:[%s1 + $0x48] sm:$0xff]
  %v46 = vmul.f32 %v14, %v36
  %v47 = vmul.f32 %v15, %v37
  %v48 = vmul.f32 %v16, %v38
  %v49 = vmul.f32 %v17, %v39
  %v50 = vadd.f32 %v46, %v48
  %v51 = vadd.f32 %v47, %v49
  %v52 = vmul.f32 %v18, %v40
  %v53 = vmul.f32 %v19, %v41
  %v54 = vadd.f32 %v50, %v52
  %v55 = vadd.f32 %v51, %v53
  %v56 = vmul.f32 %v20, %v42
  %v57 = vmul.f32 %v21, %v43
  %v58 = vadd.f32 %v54, %v56
  %v59 = vadd.f32 %v55, %v57
  %v60 = vmul.f32 %v22, %v44
  %v61 = vmul.f32 %v23, %v45
  %v62 = vadd.f32 %v58, %v60
  %v63 = vadd.f32 %v59, %v61
  %v64 = vrot.slane %v62, 4
  %v65 = vadd.f32 %v62, %v64
  %v66 = vrot.slane %v65, 2
  %v67 = vadd.f32 %v65, %v66
  %v68 = vrot.slane %v67, 1
  %v69 = vadd.f32 %v67, %v68
  %v70 = vrot.slane %v63, 4
  %v71 = vadd.f32 %v63, %v70
  %v72 = vrot.slane %v71, 2
  %v73 = vadd.f32 %v71, %v72
  %v74 = vrot.slane %v73, 1
  %v75 = vadd.f32 %v73, %v74
  %v77 = vlaneseq
  %v78 = vshrl.u32 %v77, 7
  %v79 = vsub.s32 0, %v78
  %v80 = vrot.slane %v35, %v79
  %v81 = vlaneseq
  %v82 = vshrl.u32 %v81, 7
  %v83 = vsub.s32 4, %v82
  %v84 = vrot.slane %v35, %v83
  %v87 = vadd.f32 %v69, %v80
  %v88 = vadd.f32 %v75, %v84
  %v89 = vmul.f32 %v25, %v36
  %v90 = vmul.f32 %v26, %v37
  %v91 = vmul.f32 %v27, %v38
  %v92 = vmul.f32 %v28, %v39
  %v93 = vadd.f32 %v89, %v91
  %v94 = vadd.f32 %v90, %v92
  %v95 = vmul.f32 %v29, %v40
  %v96 = vmul.f32 %v30, %v41
  %v97 = vadd.f32 %v93, %v95
  %v98 = vadd.f32 %v94, %v96
  %v99 = vmul.f32 %v31, %v42
  %v100 = vmul.f32 %v32, %v43
  %v101 = vadd.f32 %v97, %v99
  %v102 = vadd.f32 %v98, %v100
  %v103 = vmul.f32 %v33, %v44
  %v104 = vmul.f32 %v34, %v45
  %v105 = vadd.f32 %v101, %v103
  %v106 = vadd.f32 %v102, %v104
  %v107 = vrot.slane %v105, 4
  %v108 = vadd.f32 %v105, %v107
  %v109 = vrot.slane %v108, 2
  %v110 = vadd.f32 %v108, %v109
  %v111 = vrot.slane %v110, 1
  %v112 = vadd.f32 %v110, %v111
  %v113 = vrot.slane %v106, 4
  %v114 = vadd.f32 %v106, %v113
  %v115 = vrot.slane %v114, 2
  %v116 = vadd.f32 %v114, %v115
  %v117 = vrot.slane %v116, 1
  %v118 = vadd.f32 %v116, %v117
  %v119 = vadd.f32 %v112, %v80
  %v120 = vadd.f32 %v118, %v84
  %s121 = scalar_lea.vmem %s1, 80
  %v122 = vld [vmem:[%s121] sm:$0xff]
  %v123 = vld [vmem:[%s121 + $0x8] sm:$0xff]
  %v124 = vld [vmem:[%s121 + $0x10] sm:$0xff]
  %v125 = vld [vmem:[%s121 + $0x18] sm:$0xff]
  %v126 = vld [vmem:[%s121 + $0x20] sm:$0xff]
  %v127 = vld [vmem:[%s121 + $0x28] sm:$0xff]
  %v128 = vld [vmem:[%s121 + $0x30] sm:$0xff]
  %v129 = vld [vmem:[%s121 + $0x38] sm:$0xff]
  %v130 = vld [vmem:[%s121 + $0x40] sm:$0xff]
  %v131 = vld [vmem:[%s121 + $0x48] sm:$0xff]
  %v132 = vmul.f32 %v14, %v122
  %v133 = vmul.f32 %v15, %v123
  %v134 = vmul.f32 %v16, %v124
  %v135 = vmul.f32 %v17, %v125
  %v136 = vadd.f32 %v132, %v134
  %v137 = vadd.f32 %v133, %v135
  %v138 = vmul.f32 %v18, %v126
  %v139 = vmul.f32 %v19, %v127
  %v140 = vadd.f32 %v136, %v138
  %v141 = vadd.f32 %v137, %v139
  %v142 = vmul.f32 %v20, %v128
  %v143 = vmul.f32 %v21, %v129
  %v144 = vadd.f32 %v140, %v142
  %v145 = vadd.f32 %v141, %v143
  %v146 = vmul.f32 %v22, %v130
  %v147 = vmul.f32 %v23, %v131
  %v148 = vadd.f32 %v144, %v146
  %v149 = vadd.f32 %v145, %v147
  %v150 = vrot.slane %v148, 4
  %v151 = vadd.f32 %v148, %v150
  %v152 = vrot.slane %v151, 2
  %v153 = vadd.f32 %v151, %v152
  %v154 = vrot.slane %v153, 1
  %v155 = vadd.f32 %v153, %v154
  %v156 = vrot.slane %v149, 4
  %v157 = vadd.f32 %v149, %v156
  %v158 = vrot.slane %v157, 2
  %v159 = vadd.f32 %v157, %v158
  %v160 = vrot.slane %v159, 1
  %v161 = vadd.f32 %v159, %v160
  %v162 = vlaneseq
  %v163 = vshrl.u32 %v162, 7
  %v164 = vsub.s32 1, %v163
  %v165 = vrot.slane %v35, %v164
  %v166 = vlaneseq
  %v167 = vshrl.u32 %v166, 7
  %v168 = vsub.s32 5, %v167
  %v169 = vrot.slane %v35, %v168
  %v172 = vadd.f32 %v155, %v165
  %v173 = vadd.f32 %v161, %v169
  %v174 = vmul.f32 %v25, %v122
  %v175 = vmul.f32 %v26, %v123
  %v176 = vmul.f32 %v27, %v124
  %v177 = vmul.f32 %v28, %v125
  %v178 = vadd.f32 %v174, %v176
  %v179 = vadd.f32 %v175, %v177
  %v180 = vmul.f32 %v29, %v126
  %v181 = vmul.f32 %v30, %v127
  %v182 = vadd.f32 %v178, %v180
  %v183 = vadd.f32 %v179, %v181
  %v184 = vmul.f32 %v31, %v128
  %v185 = vmul.f32 %v32, %v129
  %v186 = vadd.f32 %v182, %v184
  %v187 = vadd.f32 %v183, %v185
  %v188 = vmul.f32 %v33, %v130
  %v189 = vmul.f32 %v34, %v131
  %v190 = vadd.f32 %v186, %v188
  %v191 = vadd.f32 %v187, %v189
  %v192 = vrot.slane %v190, 4
  %v193 = vadd.f32 %v190, %v192
  %v194 = vrot.slane %v193, 2
  %v195 = vadd.f32 %v193, %v194
  %v196 = vrot.slane %v195, 1
  %v197 = vadd.f32 %v195, %v196
  %v198 = vrot.slane %v191, 4
  %v199 = vadd.f32 %v191, %v198
  %v200 = vrot.slane %v199, 2
  %v201 = vadd.f32 %v199, %v200
  %v202 = vrot.slane %v201, 1
  %v203 = vadd.f32 %v201, %v202
  %v204 = vadd.f32 %v197, %v165
  %v205 = vadd.f32 %v203, %v169
  %s206 = scalar_lea.vmem %s1, 160
  %v207 = vld [vmem:[%s206] sm:$0xff]
  %v208 = vld [vmem:[%s206 + $0x8] sm:$0xff]
  %v209 = vld [vmem:[%s206 + $0x10] sm:$0xff]
  %v210 = vld [vmem:[%s206 + $0x18] sm:$0xff]
  %v211 = vld [vmem:[%s206 + $0x20] sm:$0xff]
  %v212 = vld [vmem:[%s206 + $0x28] sm:$0xff]
  %v213 = vld [vmem:[%s206 + $0x30] sm:$0xff]
  %v214 = vld [vmem:[%s206 + $0x38] sm:$0xff]
  %v215 = vld [vmem:[%s206 + $0x40] sm:$0xff]
  %v216 = vld [vmem:[%s206 + $0x48] sm:$0xff]
  %v217 = vmul.f32 %v14, %v207
  %v218 = vmul.f32 %v15, %v208
  %v219 = vmul.f32 %v16, %v209
  %v220 = vmul.f32 %v17, %v210
  %v221 = vadd.f32 %v217, %v219
  %v222 = vadd.f32 %v218, %v220
  %v223 = vmul.f32 %v18, %v211
  %v224 = vmul.f32 %v19, %v212
  %v225 = vadd.f32 %v221, %v223
  %v226 = vadd.f32 %v222, %v224
  %v227 = vmul.f32 %v20, %v213
  %v228 = vmul.f32 %v21, %v214
  %v229 = vadd.f32 %v225, %v227
  %v230 = vadd.f32 %v226, %v228
  %v231 = vmul.f32 %v22, %v215
  %v232 = vmul.f32 %v23, %v216
  %v233 = vadd.f32 %v229, %v231
  %v234 = vadd.f32 %v230, %v232
  %v235 = vrot.slane %v233, 4
  %v236 = vadd.f32 %v233, %v235
  %v237 = vrot.slane %v236, 2
  %v238 = vadd.f32 %v236, %v237
  %v239 = vrot.slane %v238, 1
  %v240 = vadd.f32 %v238, %v239
  %v241 = vrot.slane %v234, 4
  %v242 = vadd.f32 %v234, %v241
  %v243 = vrot.slane %v242, 2
  %v244 = vadd.f32 %v242, %v243
  %v245 = vrot.slane %v244, 1
  %v246 = vadd.f32 %v244, %v245
  %v247 = vlaneseq
  %v248 = vshrl.u32 %v247, 7
  %v249 = vsub.s32 2, %v248
  %v250 = vrot.slane %v35, %v249
  %v251 = vlaneseq
  %v252 = vshrl.u32 %v251, 7
  %v253 = vsub.s32 6, %v252
  %v254 = vrot.slane %v35, %v253
  %v257 = vadd.f32 %v240, %v250
  %v258 = vadd.f32 %v246, %v254
  %v259 = vmul.f32 %v25, %v207
  %v260 = vmul.f32 %v26, %v208
  %v261 = vmul.f32 %v27, %v209
  %v262 = vmul.f32 %v28, %v210
  %v263 = vadd.f32 %v259, %v261
  %v264 = vadd.f32 %v260, %v262
  %v265 = vmul.f32 %v29, %v211
  %v266 = vmul.f32 %v30, %v212
  %v267 = vadd.f32 %v263, %v265
  %v268 = vadd.f32 %v264, %v266
  %v269 = vmul.f32 %v31, %v213
  %v270 = vmul.f32 %v32, %v214
  %v271 = vadd.f32 %v267, %v269
  %v272 = vadd.f32 %v268, %v270
  %v273 = vmul.f32 %v33, %v215
  %v274 = vmul.f32 %v34, %v216
  %v275 = vadd.f32 %v271, %v273
  %v276 = vadd.f32 %v272, %v274
  %v277 = vrot.slane %v275, 4
  %v278 = vadd.f32 %v275, %v277
  %v279 = vrot.slane %v278, 2
  %v280 = vadd.f32 %v278, %v279
  %v281 = vrot.slane %v280, 1
  %v282 = vadd.f32 %v280, %v281
  %v283 = vrot.slane %v276, 4
  %v284 = vadd.f32 %v276, %v283
  %v285 = vrot.slane %v284, 2
  %v286 = vadd.f32 %v284, %v285
  %v287 = vrot.slane %v286, 1
  %v288 = vadd.f32 %v286, %v287
  %v289 = vadd.f32 %v282, %v250
  %v290 = vadd.f32 %v288, %v254
  %s291 = scalar_lea.vmem %s1, 240
  %v292 = vld [vmem:[%s291] sm:$0xff]
  %v293 = vld [vmem:[%s291 + $0x8] sm:$0xff]
  %v294 = vld [vmem:[%s291 + $0x10] sm:$0xff]
  %v295 = vld [vmem:[%s291 + $0x18] sm:$0xff]
  %v296 = vld [vmem:[%s291 + $0x20] sm:$0xff]
  %v297 = vld [vmem:[%s291 + $0x28] sm:$0xff]
  %v298 = vld [vmem:[%s291 + $0x30] sm:$0xff]
  %v299 = vld [vmem:[%s291 + $0x38] sm:$0xff]
  %v300 = vld [vmem:[%s291 + $0x40] sm:$0xff]
  %v301 = vld [vmem:[%s291 + $0x48] sm:$0xff]
  %v302 = vmul.f32 %v14, %v292
  %v303 = vmul.f32 %v15, %v293
  %v304 = vmul.f32 %v16, %v294
  %v305 = vmul.f32 %v17, %v295
  %v306 = vadd.f32 %v302, %v304
  %v307 = vadd.f32 %v303, %v305
  %v308 = vmul.f32 %v18, %v296
  %v309 = vmul.f32 %v19, %v297
  %v310 = vadd.f32 %v306, %v308
  %v311 = vadd.f32 %v307, %v309
  %v312 = vmul.f32 %v20, %v298
  %v313 = vmul.f32 %v21, %v299
  %v314 = vadd.f32 %v310, %v312
  %v315 = vadd.f32 %v311, %v313
  %v316 = vmul.f32 %v22, %v300
  %v317 = vmul.f32 %v23, %v301
  %v318 = vadd.f32 %v314, %v316
  %v319 = vadd.f32 %v315, %v317
  %v320 = vrot.slane %v318, 4
  %v321 = vadd.f32 %v318, %v320
  %v322 = vrot.slane %v321, 2
  %v323 = vadd.f32 %v321, %v322
  %v324 = vrot.slane %v323, 1
  %v325 = vadd.f32 %v323, %v324
  %v326 = vrot.slane %v319, 4
  %v327 = vadd.f32 %v319, %v326
  %v328 = vrot.slane %v327, 2
  %v329 = vadd.f32 %v327, %v328
  %v330 = vrot.slane %v329, 1
  %v331 = vadd.f32 %v329, %v330
  %v332 = vlaneseq
  %v333 = vshrl.u32 %v332, 7
  %v334 = vsub.s32 3, %v333
  %v335 = vrot.slane %v35, %v334
  %v336 = vlaneseq
  %v337 = vshrl.u32 %v336, 7
  %v338 = vsub.s32 7, %v337
  %v339 = vrot.slane %v35, %v338
  %v342 = vadd.f32 %v325, %v335
  %v343 = vadd.f32 %v331, %v339
  %v344 = vmul.f32 %v25, %v292
  %v345 = vmul.f32 %v26, %v293
  %v346 = vmul.f32 %v27, %v294
  %v347 = vmul.f32 %v28, %v295
  %v348 = vadd.f32 %v344, %v346
  %v349 = vadd.f32 %v345, %v347
  %v350 = vmul.f32 %v29, %v296
  %v351 = vmul.f32 %v30, %v297
  %v352 = vadd.f32 %v348, %v350
  %v353 = vadd.f32 %v349, %v351
  %v354 = vmul.f32 %v31, %v298
  %v355 = vmul.f32 %v32, %v299
  %v356 = vadd.f32 %v352, %v354
  %v357 = vadd.f32 %v353, %v355
  %v358 = vmul.f32 %v33, %v300
  %v359 = vmul.f32 %v34, %v301
  %v360 = vadd.f32 %v356, %v358
  %v361 = vadd.f32 %v357, %v359
  %v362 = vrot.slane %v360, 4
  %v363 = vadd.f32 %v360, %v362
  %v364 = vrot.slane %v363, 2
  %v365 = vadd.f32 %v363, %v364
  %v366 = vrot.slane %v365, 1
  %v367 = vadd.f32 %v365, %v366
  %v368 = vrot.slane %v361, 4
  %v369 = vadd.f32 %v361, %v368
  %v370 = vrot.slane %v369, 2
  %v371 = vadd.f32 %v369, %v370
  %v372 = vrot.slane %v371, 1
  %v373 = vadd.f32 %v371, %v372
  %v374 = vadd.f32 %v367, %v335
  %v375 = vadd.f32 %v373, %v339
  %v378 = vrot.slane %v172, 7
  %v379 = vrot.slane %v173, 7
  %v384 = vrot.slane %v257, 6
  %v385 = vrot.slane %v258, 6
  %v390 = vrot.slane %v342, 5
  %v391 = vrot.slane %v343, 5
  %vm394 = vcmask 1040384
  %v395 = vsel %vm394, %v87, %v378
  %v396 = vsel %vm394, %v88, %v379
  %vm397 = vcmask 1041408
  %v398 = vsel %vm397, %v395, %v384
  %v399 = vsel %vm397, %v396, %v385
  %vm400 = vcmask 1042432
  %v401 = vsel %vm400, %v398, %v390
  %v402 = vsel %vm400, %v399, %v391
  %v405 = vrot.slane %v204, 7
  %v406 = vrot.slane %v205, 7
  %v411 = vrot.slane %v289, 6
  %v412 = vrot.slane %v290, 6
  %v417 = vrot.slane %v374, 5
  %v418 = vrot.slane %v375, 5
  %v421 = vsel %vm394, %v119, %v405
  %v422 = vsel %vm394, %v120, %v406
  %v423 = vsel %vm397, %v421, %v411
  %v424 = vsel %vm397, %v422, %v412
  %v425 = vsel %vm400, %v423, %v417
  %v426 = vsel %vm400, %v424, %v418
  %v431 = vcombine.low %v401, %v402
  %v432 = vcombine.low %v425, %v426
  %435 = vst [vmem:[%s3] sm:$0xff] %v431
  %436 = vst [vmem:[%s3 + $0x8] sm:$0xff] %v432
  // Predicated region
  $region14: #{_lambda_.1} parent=0 // pred_check
    _
  $region15: #{_lambda_.1} parent=0 // pred_check_branch
    %438 = sbr.rel (0) target = $region17
  $region16: #{_lambda_.1} parent=0 // pred_region
    _
  $region17: #{_lambda_.1} parent=0 // pred_fallthru
    _
  // Predicated region
  $region18: #{_lambda_.1} parent=0 // pred_check
    _
  $region19: #{_lambda_.1} parent=0 // pred_check_branch
    %440 = sbr.rel (0) target = $region21
  $region20: #{_lambda_.1} parent=0 // pred_region
    _
  $region21: #{_lambda_.1} parent=0 // pred_fallthru
    _

</llo_original>
